<compile_context>
chip_gen: v7x
topology: tpu7x:2x2x1
jax: 0.10.0
libtpu: 0.0.40
codegen_flags: <defaults>
</compile_context>

<pallas_src>
import functools

import jax
import jax.numpy as jnp
from jax.experimental import pallas as pl
from jax.experimental.pallas import tpu as pltpu

_SUBLANE = 8


def _round_up(n, m):
    return ((n + m - 1) // m) * m


def _kappa_kernel(x_ref,
                  w1_ref, b1_ref,
                  w2_ref, b2_ref,
                  w3_ref, b3_ref,
                  w4_ref, b4_ref,
                  w5_ref, b5_ref,
                  o_ref,
                  *, compute_dtype):
    cd = compute_dtype
    h = x_ref[...].astype(cd)

    # Layer 1: linear + bias + relu (dropout = identity in eval mode)
    h = jnp.dot(h, w1_ref[...], preferred_element_type=jnp.float32)
    h = jnp.maximum(h + b1_ref[...], 0.0)
    # Layer 2
    h = jnp.dot(h.astype(cd), w2_ref[...], preferred_element_type=jnp.float32)
    h = jnp.maximum(h + b2_ref[...], 0.0)
    # Layer 3
    h = jnp.dot(h.astype(cd), w3_ref[...], preferred_element_type=jnp.float32)
    h = jnp.maximum(h + b3_ref[...], 0.0)
    # Layer 4
    h = jnp.dot(h.astype(cd), w4_ref[...], preferred_element_type=jnp.float32)
    h = jnp.maximum(h + b4_ref[...], 0.0)
    # Layer 5 (no activation)
    h = jnp.dot(h.astype(cd), w5_ref[...], preferred_element_type=jnp.float32)
    o_ref[...] = (h + b5_ref[...]).astype(o_ref.dtype)
    # TODO(synk): training-mode dropout (p=0.25) would use pltpu.prng_seed +
    # pltpu.prng_random_bits; forward here matches nn.Dropout under model.eval().


def prepare_kappa_params(params, compute_dtype=jnp.bfloat16):
    """One-time parameter prep (hoisted out of the hot forward path).

    params: list of 5 (W, b) with W (in, out), b (out,) or (1, out).
    Weights are cast to `compute_dtype` (bf16 default -> single-pass MXU,
    halved weight DMA); biases stay f32 and are added to the f32 accumulator.
    Returns a flat tuple (w1, b1, ..., w5, b5).
    """
    flat = []
    for w, b in params:
        flat.append(jnp.asarray(w).astype(compute_dtype))
        flat.append(jnp.asarray(b).reshape(1, -1).astype(jnp.float32))
    return tuple(flat)


def kappa_layers_forward(x, prepped_params, *, block_batch=2048):
    """x: (B, input_nodes) f32. prepped_params: output of prepare_kappa_params.

    Compute dtype is inferred from the prepped weight dtype; accumulation is
    always f32. Output is f32 of shape (B, output_nodes).
    """
    (w1, b1, w2, b2, w3, b3, w4, b4, w5, b5) = prepped_params
    compute_dtype = w1.dtype
    B, in_f = x.shape
    out_f = w5.shape[1]

    # ---- batch tiling (natural feature widths everywhere) ----
    tb = _round_up(min(block_batch, _round_up(B, _SUBLANE)), _SUBLANE)
    b_pad = _round_up(B, tb)
    xp = x.astype(jnp.float32)
    if b_pad != B:
        xp = jnp.pad(xp, ((0, b_pad - B), (0, 0)))
    grid = (b_pad // tb,)

    weight_args = (w1, b1, w2, b2, w3, b3, w4, b4, w5, b5)

    # x / out tiled along the batch at natural width (last dim == full array
    # dim, so the (8,128) rule is satisfied); weights & biases are full blocks
    # with constant index_maps -> DMA'd once, VMEM-resident across all tiles.
    in_specs = [pl.BlockSpec((tb, in_f), lambda i: (i, 0))]
    in_specs += [pl.BlockSpec(a.shape, lambda i: (0, 0)) for a in weight_args]
    out_spec = pl.BlockSpec((tb, out_f), lambda i: (i, 0))

    dims = [in_f, w1.shape[1], w2.shape[1], w3.shape[1], w4.shape[1], out_f]
    flops = 2 * b_pad * sum(pi * po for pi, po in zip(dims[:-1], dims[1:]))
    bytes_accessed = (xp.size * xp.dtype.itemsize
                      + sum(a.size * a.dtype.itemsize for a in weight_args)
                      + b_pad * out_f * 4)
    cost = pl.CostEstimate(flops=flops, transcendentals=0,
                           bytes_accessed=bytes_accessed)

    out_p = pl.pallas_call(
        functools.partial(_kappa_kernel, compute_dtype=compute_dtype),
        out_shape=jax.ShapeDtypeStruct((b_pad, out_f), jnp.float32),
        grid=grid,
        in_specs=in_specs,
        out_specs=out_spec,
        compiler_params=pltpu.CompilerParams(
            dimension_semantics=("parallel",),      # megacore sharding on v7x
            vmem_limit_bytes=32 * 1024 * 1024,      # safe on v5e/v6e/v7x (64 MiB/TC)
        ),
        cost_estimate=cost,
    )(xp, *weight_args)

    return out_p[:B]


def _init_linear(key, fan_in, fan_out):
    # Matches torch.nn.Linear default init: U(-1/sqrt(fan_in), 1/sqrt(fan_in))
    kw, kb = jax.random.split(key)
    bound = 1.0 / jnp.sqrt(jnp.asarray(fan_in, jnp.float32))
    W = jax.random.uniform(kw, (fan_in, fan_out), jnp.float32, -bound, bound)
    b = jax.random.uniform(kb, (1, fan_out), jnp.float32, -bound, bound)
    return W, b


if __name__ == "__main__":
    input_nodes, hidden_nodes, output_nodes = 16, 32, 4
    batch = 8

    key = jax.random.PRNGKey(0)
    keys = jax.random.split(key, 6)

    params = [
        _init_linear(keys[0], input_nodes, hidden_nodes),
        _init_linear(keys[1], hidden_nodes, hidden_nodes),
        _init_linear(keys[2], hidden_nodes, hidden_nodes),
        _init_linear(keys[3], hidden_nodes, hidden_nodes),
        _init_linear(keys[4], hidden_nodes, output_nodes),
    ]
    x = jax.random.normal(keys[5], (batch, input_nodes), jnp.float32)

    # Pure-JAX reference (eval-mode dropout == identity).
    h = x
    for i, (W, b) in enumerate(params):
        h = h @ W + b
        if i < 4:
            h = jnp.maximum(h, 0.0)

    # f32 compute path: bit-matches the reference.
    prepped_f32 = prepare_kappa_params(params, compute_dtype=jnp.float32)
    out_f32 = jax.block_until_ready(kappa_layers_forward(x, prepped_f32))
    assert out_f32.shape == (batch, output_nodes)
    assert jnp.allclose(out_f32, h, atol=1e-5, rtol=1e-5), "f32 mismatch vs reference"

    # bf16 compute path (default / fast MXU path): looser tolerance.
    prepped_bf16 = prepare_kappa_params(params)          # bf16 weights, f32 accum
    out_bf16 = jax.block_until_ready(kappa_layers_forward(x, prepped_bf16))
    assert out_bf16.shape == (batch, output_nodes)
    assert jnp.allclose(out_bf16, h, atol=5e-2, rtol=5e-2), "bf16 mismatch vs reference"

    print("KERNEL_OK")
</pallas_src>

<mosaic_0001>
module attributes {stable_mosaic.version = 11 : i64} {
  func.func @_kappa_kernel(%arg0: i32, %arg1: memref<8x16xf32, #tpu.memory_space<vmem>>, %arg2: memref<16x32xf32, #tpu.memory_space<vmem>>, %arg3: memref<1x32xf32, #tpu.memory_space<vmem>>, %arg4: memref<32x32xf32, #tpu.memory_space<vmem>>, %arg5: memref<1x32xf32, #tpu.memory_space<vmem>>, %arg6: memref<32x32xf32, #tpu.memory_space<vmem>>, %arg7: memref<1x32xf32, #tpu.memory_space<vmem>>, %arg8: memref<32x32xf32, #tpu.memory_space<vmem>>, %arg9: memref<1x32xf32, #tpu.memory_space<vmem>>, %arg10: memref<32x4xf32, #tpu.memory_space<vmem>>, %arg11: memref<1x4xf32, #tpu.memory_space<vmem>>, %arg12: memref<8x4xf32, #tpu.memory_space<vmem>>) attributes {dimension_semantics = [#tpu.dimension_semantics<parallel>], iteration_bounds = array<i64: 1>, scalar_prefetch = 0 : i64, scratch_operands = 0 : i64, tpu.core_type = #tpu.core_type<tc>, window_params = [{transform_indices = @transform_0, window_bounds = array<i64: 8, 16>}, {pipeline_mode = #tpu.pipeline_mode<synchronous>, transform_indices = @transform_1, window_bounds = array<i64: 16, 32>}, {pipeline_mode = #tpu.pipeline_mode<synchronous>, transform_indices = @transform_2, window_bounds = array<i64: 1, 32>}, {pipeline_mode = #tpu.pipeline_mode<synchronous>, transform_indices = @transform_3, window_bounds = array<i64: 32, 32>}, {pipeline_mode = #tpu.pipeline_mode<synchronous>, transform_indices = @transform_4, window_bounds = array<i64: 1, 32>}, {pipeline_mode = #tpu.pipeline_mode<synchronous>, transform_indices = @transform_5, window_bounds = array<i64: 32, 32>}, {pipeline_mode = #tpu.pipeline_mode<synchronous>, transform_indices = @transform_6, window_bounds = array<i64: 1, 32>}, {pipeline_mode = #tpu.pipeline_mode<synchronous>, transform_indices = @transform_7, window_bounds = array<i64: 32, 32>}, {pipeline_mode = #tpu.pipeline_mode<synchronous>, transform_indices = @transform_8, window_bounds = array<i64: 1, 32>}, {pipeline_mode = #tpu.pipeline_mode<synchronous>, transform_indices = @transform_9, window_bounds = array<i64: 32, 4>}, {pipeline_mode = #tpu.pipeline_mode<synchronous>, transform_indices = @transform_10, window_bounds = array<i64: 1, 4>}, {transform_indices = @transform_11, window_bounds = array<i64: 8, 4>}]} {
    %c0 = arith.constant 0 : index
    %c0_0 = arith.constant 0 : index
    %0 = vector.load %arg1[%c0, %c0_0] : memref<8x16xf32, #tpu.memory_space<vmem>>, vector<8x16xf32>
    %c0_1 = arith.constant 0 : index
    %c0_2 = arith.constant 0 : index
    %1 = vector.load %arg2[%c0_1, %c0_2] : memref<16x32xf32, #tpu.memory_space<vmem>>, vector<16x32xf32>
    %cst = arith.constant dense<0.000000e+00> : vector<8x32xf32>
    %2 = tpu.matmul %0, %1, %cst {dimension_numbers = #tpu.dot_dimension_numbers<[1], [0], [0], [1], [0, 0, 1, 1], [], []>} : vector<8x16xf32>, vector<16x32xf32>, vector<8x32xf32> -> vector<8x32xf32>
    %c0_3 = arith.constant 0 : index
    %c0_4 = arith.constant 0 : index
    %3 = vector.load %arg3[%c0_3, %c0_4] : memref<1x32xf32, #tpu.memory_space<vmem>>, vector<1x32xf32>
    %4 = vector.broadcast %3 : vector<1x32xf32> to vector<8x32xf32>
    %5 = arith.addf %2, %4 : vector<8x32xf32>
    %cst_5 = arith.constant 0.000000e+00 : f32
    %6 = vector.broadcast %cst_5 : f32 to vector<8x32xf32>
    %7 = arith.maximumf %5, %6 : vector<8x32xf32>
    %c0_6 = arith.constant 0 : index
    %c0_7 = arith.constant 0 : index
    %8 = vector.load %arg4[%c0_6, %c0_7] : memref<32x32xf32, #tpu.memory_space<vmem>>, vector<32x32xf32>
    %cst_8 = arith.constant dense<0.000000e+00> : vector<8x32xf32>
    %9 = tpu.matmul %7, %8, %cst_8 {dimension_numbers = #tpu.dot_dimension_numbers<[1], [0], [0], [1], [0, 0, 1, 1], [], []>} : vector<8x32xf32>, vector<32x32xf32>, vector<8x32xf32> -> vector<8x32xf32>
    %c0_9 = arith.constant 0 : index
    %c0_10 = arith.constant 0 : index
    %10 = vector.load %arg5[%c0_9, %c0_10] : memref<1x32xf32, #tpu.memory_space<vmem>>, vector<1x32xf32>
    %11 = vector.broadcast %10 : vector<1x32xf32> to vector<8x32xf32>
    %12 = arith.addf %9, %11 : vector<8x32xf32>
    %cst_11 = arith.constant 0.000000e+00 : f32
    %13 = vector.broadcast %cst_11 : f32 to vector<8x32xf32>
    %14 = arith.maximumf %12, %13 : vector<8x32xf32>
    %c0_12 = arith.constant 0 : index
    %c0_13 = arith.constant 0 : index
    %15 = vector.load %arg6[%c0_12, %c0_13] : memref<32x32xf32, #tpu.memory_space<vmem>>, vector<32x32xf32>
    %cst_14 = arith.constant dense<0.000000e+00> : vector<8x32xf32>
    %16 = tpu.matmul %14, %15, %cst_14 {dimension_numbers = #tpu.dot_dimension_numbers<[1], [0], [0], [1], [0, 0, 1, 1], [], []>} : vector<8x32xf32>, vector<32x32xf32>, vector<8x32xf32> -> vector<8x32xf32>
    %c0_15 = arith.constant 0 : index
    %c0_16 = arith.constant 0 : index
    %17 = vector.load %arg7[%c0_15, %c0_16] : memref<1x32xf32, #tpu.memory_space<vmem>>, vector<1x32xf32>
    %18 = vector.broadcast %17 : vector<1x32xf32> to vector<8x32xf32>
    %19 = arith.addf %16, %18 : vector<8x32xf32>
    %cst_17 = arith.constant 0.000000e+00 : f32
    %20 = vector.broadcast %cst_17 : f32 to vector<8x32xf32>
    %21 = arith.maximumf %19, %20 : vector<8x32xf32>
    %c0_18 = arith.constant 0 : index
    %c0_19 = arith.constant 0 : index
    %22 = vector.load %arg8[%c0_18, %c0_19] : memref<32x32xf32, #tpu.memory_space<vmem>>, vector<32x32xf32>
    %cst_20 = arith.constant dense<0.000000e+00> : vector<8x32xf32>
    %23 = tpu.matmul %21, %22, %cst_20 {dimension_numbers = #tpu.dot_dimension_numbers<[1], [0], [0], [1], [0, 0, 1, 1], [], []>} : vector<8x32xf32>, vector<32x32xf32>, vector<8x32xf32> -> vector<8x32xf32>
    %c0_21 = arith.constant 0 : index
    %c0_22 = arith.constant 0 : index
    %24 = vector.load %arg9[%c0_21, %c0_22] : memref<1x32xf32, #tpu.memory_space<vmem>>, vector<1x32xf32>
    %25 = vector.broadcast %24 : vector<1x32xf32> to vector<8x32xf32>
    %26 = arith.addf %23, %25 : vector<8x32xf32>
    %cst_23 = arith.constant 0.000000e+00 : f32
    %27 = vector.broadcast %cst_23 : f32 to vector<8x32xf32>
    %28 = arith.maximumf %26, %27 : vector<8x32xf32>
    %c0_24 = arith.constant 0 : index
    %c0_25 = arith.constant 0 : index
    %29 = vector.load %arg10[%c0_24, %c0_25] : memref<32x4xf32, #tpu.memory_space<vmem>>, vector<32x4xf32>
    %cst_26 = arith.constant dense<0.000000e+00> : vector<8x4xf32>
    %30 = tpu.matmul %28, %29, %cst_26 {dimension_numbers = #tpu.dot_dimension_numbers<[1], [0], [0], [1], [0, 0, 1, 1], [], []>} : vector<8x32xf32>, vector<32x4xf32>, vector<8x4xf32> -> vector<8x4xf32>
    %c0_27 = arith.constant 0 : index
    %c0_28 = arith.constant 0 : index
    %31 = vector.load %arg11[%c0_27, %c0_28] : memref<1x4xf32, #tpu.memory_space<vmem>>, vector<1x4xf32>
    %32 = vector.broadcast %31 : vector<1x4xf32> to vector<8x4xf32>
    %33 = arith.addf %30, %32 : vector<8x4xf32>
    %c0_29 = arith.constant 0 : index
    %c0_30 = arith.constant 0 : index
    %34 = vector.load %arg12[%c0_29, %c0_30] : memref<8x4xf32, #tpu.memory_space<vmem>>, vector<8x4xf32>
    tpu.vector_store %arg12[%c0_29, %c0_30], %33 {strides = array<i32>} : memref<8x4xf32, #tpu.memory_space<vmem>>, vector<8x4xf32>,
    return
  }
  func.func @transform_0(%arg0: i32) -> (i32, i32) {
    %c0_i32 = arith.constant 0 : i32
    %c0_i32_0 = arith.constant 0 : i32
    return %arg0, %c0_i32 : i32, i32
  }
  func.func @transform_1(%arg0: i32) -> (i32, i32) {
    %c0_i32 = arith.constant 0 : i32
    %c0_i32_0 = arith.constant 0 : i32
    %c0_i32_1 = arith.constant 0 : i32
    return %c0_i32, %c0_i32_0 : i32, i32
  }
  func.func @transform_2(%arg0: i32) -> (i32, i32) {
    %c0_i32 = arith.constant 0 : i32
    %c0_i32_0 = arith.constant 0 : i32
    %c0_i32_1 = arith.constant 0 : i32
    return %c0_i32, %c0_i32_0 : i32, i32
  }
  func.func @transform_3(%arg0: i32) -> (i32, i32) {
    %c0_i32 = arith.constant 0 : i32
    %c0_i32_0 = arith.constant 0 : i32
    %c0_i32_1 = arith.constant 0 : i32
    return %c0_i32, %c0_i32_0 : i32, i32
  }
  func.func @transform_4(%arg0: i32) -> (i32, i32) {
    %c0_i32 = arith.constant 0 : i32
    %c0_i32_0 = arith.constant 0 : i32
    %c0_i32_1 = arith.constant 0 : i32
    return %c0_i32, %c0_i32_0 : i32, i32
  }
  func.func @transform_5(%arg0: i32) -> (i32, i32) {
    %c0_i32 = arith.constant 0 : i32
    %c0_i32_0 = arith.constant 0 : i32
    %c0_i32_1 = arith.constant 0 : i32
    return %c0_i32, %c0_i32_0 : i32, i32
  }
  func.func @transform_6(%arg0: i32) -> (i32, i32) {
    %c0_i32 = arith.constant 0 : i32
    %c0_i32_0 = arith.constant 0 : i32
    %c0_i32_1 = arith.constant 0 : i32
    return %c0_i32, %c0_i32_0 : i32, i32
  }
  func.func @transform_7(%arg0: i32) -> (i32, i32) {
    %c0_i32 = arith.constant 0 : i32
    %c0_i32_0 = arith.constant 0 : i32
    %c0_i32_1 = arith.constant 0 : i32
    return %c0_i32, %c0_i32_0 : i32, i32
  }
  func.func @transform_8(%arg0: i32) -> (i32, i32) {
    %c0_i32 = arith.constant 0 : i32
    %c0_i32_0 = arith.constant 0 : i32
    %c0_i32_1 = arith.constant 0 : i32
    return %c0_i32, %c0_i32_0 : i32, i32
  }
  func.func @transform_9(%arg0: i32) -> (i32, i32) {
    %c0_i32 = arith.constant 0 : i32
    %c0_i32_0 = arith.constant 0 : i32
    %c0_i32_1 = arith.constant 0 : i32
    return %c0_i32, %c0_i32_0 : i32, i32
  }
  func.func @transform_10(%arg0: i32) -> (i32, i32) {
    %c0_i32 = arith.constant 0 : i32
    %c0_i32_0 = arith.constant 0 : i32
    %c0_i32_1 = arith.constant 0 : i32
    return %c0_i32, %c0_i32_0 : i32, i32
  }
  func.func @transform_11(%arg0: i32) -> (i32, i32) {
    %c0_i32 = arith.constant 0 : i32
    %c0_i32_0 = arith.constant 0 : i32
    return %arg0, %c0_i32 : i32, i32
  }
}

</mosaic_0001>

<llo_original>
// kernel: tpu_custom_call.1
$region0: #{tpu_custom_call.1}
  #allocation0 [shape = 'u32[]', space=smem, size = 0x4, offset = 0x4, fixed_abs, tag = 'smem constant byte address 0x4 - core index']
  #allocation1 [shape = 'u32[144,128]{1,0:T(1,128)}', space=vmem, size = 0x12000, scoped, tag = 'internal scratch']
  %s0 = inlined_call_operand.vmem [shape: f32[8,16], index: 0, kind: input, shape index: {}]
  %s1 = inlined_call_operand.hbm [shape: f32[16,32], index: 1, kind: input, shape index: {}]
  %s2 = inlined_call_operand.vmem [shape: f32[1,32], index: 2, kind: input, shape index: {}]
  %s3 = inlined_call_operand.vmem [shape: f32[32,32], index: 3, kind: input, shape index: {}]
  %s4 = inlined_call_operand.vmem [shape: f32[1,32], index: 4, kind: input, shape index: {}]
  %s5 = inlined_call_operand.hbm [shape: f32[32,32], index: 5, kind: input, shape index: {}]
  %s6 = inlined_call_operand.vmem [shape: f32[1,32], index: 6, kind: input, shape index: {}]
  %s7 = inlined_call_operand.hbm [shape: f32[32,32], index: 7, kind: input, shape index: {}]
  %s8 = inlined_call_operand.vmem [shape: f32[1,32], index: 8, kind: input, shape index: {}]
  %s9 = inlined_call_operand.vmem [shape: f32[32,4], index: 9, kind: input, shape index: {}]
  %s10 = inlined_call_operand.vmem [shape: f32[1,4], index: 10, kind: input, shape index: {}]
  %s11 = inlined_call_operand.vmem [shape: f32[8,4], index: 11, kind: output, shape index: {}]
  %s12 = sld [smem:[#allocation0]]
  $region66: #{tpu_custom_call.1} parent=0
    _
  %s14 = ssub.s32 1, %s12
  %s15 = scalar_select 0, %s14, %s12
  $region1: #{tpu_custom_call.1} parent=0
    #allocation2 [shape = 'u8[8192]{0}', space=vmem, size = 0x2000, scoped, tag = 'input window, operand 1, single buffered']
    #allocation3 [shape = 's32[1]{0}', space=sflag, size = 0x4, scoped, tag = 'scoped memory for tpu_custom_call.1']
    #allocation4 [shape = 'u8[16384]{0}', space=vmem, size = 0x4000, scoped, tag = 'input window, operand 5, single buffered']
    #allocation5 [shape = 's32[1]{0}', space=sflag, size = 0x4, scoped, tag = 'scoped memory for tpu_custom_call.1']
    #allocation6 [shape = 'u8[16384]{0}', space=vmem, size = 0x4000, scoped, tag = 'input window, operand 7, single buffered']
    %16 = vsyncpa [#allocation3], 0
    %17 = vsyncpa [#allocation5], 0
    // Predicated region
    $region2: #{tpu_custom_call.1} parent=1 // pred_check
      _
    $region3: #{tpu_custom_call.1} parent=1 // pred_check_branch
      %19 = sbr.rel (0) target = $region5
    $region4: #{tpu_custom_call.1} parent=1 // pred_region
      _
    $region5: #{tpu_custom_call.1} parent=1 // pred_fallthru
      _
    // Predicated region
    $region6: #{tpu_custom_call.1} parent=1 // pred_check
      _
    $region7: #{tpu_custom_call.1} parent=1 // pred_check_branch
      %21 = sbr.rel (0) target = $region9
    $region8: #{tpu_custom_call.1} parent=1 // pred_region
      %s23 = ssub.s32 256, 256
      %24 = vsyncadd [#allocation3], %s23
      %s25 = sshll.u32 [#allocation2], 4
      %s26 = int_to_ptr.vmem [resolvable:$true] %s25
      %31 = dma.hbm_to_vmem [thread:$0]  %s1, 256, %s26, [#allocation3], 128, 128, 8
    $region9: #{tpu_custom_call.1} parent=1 // pred_fallthru
      _
    // Predicated region
    $region10: #{tpu_custom_call.1} parent=1 // pred_check
      _
    $region11: #{tpu_custom_call.1} parent=1 // pred_check_branch
      %33 = sbr.rel (0) target = $region13
    $region12: #{tpu_custom_call.1} parent=1 // pred_region
      _
    $region13: #{tpu_custom_call.1} parent=1 // pred_fallthru
      _
    // Predicated region
    $region14: #{tpu_custom_call.1} parent=1 // pred_check
      _
    $region15: #{tpu_custom_call.1} parent=1 // pred_check_branch
      %35 = sbr.rel (0) target = $region17
    $region16: #{tpu_custom_call.1} parent=1 // pred_region
      _
    $region17: #{tpu_custom_call.1} parent=1 // pred_fallthru
      _
    // Predicated region
    $region18: #{tpu_custom_call.1} parent=1 // pred_check
      _
    $region19: #{tpu_custom_call.1} parent=1 // pred_check_branch
      %37 = sbr.rel (0) target = $region21
    $region20: #{tpu_custom_call.1} parent=1 // pred_region
      _
    $region21: #{tpu_custom_call.1} parent=1 // pred_fallthru
      _
    // Predicated region
    $region22: #{tpu_custom_call.1} parent=1 // pred_check
      _
    $region23: #{tpu_custom_call.1} parent=1 // pred_check_branch
      %39 = sbr.rel (0) target = $region25
    $region24: #{tpu_custom_call.1} parent=1 // pred_region
      %s41 = ssub.s32 512, 512
      %42 = vsyncadd [#allocation5], %s41
      %s43 = sshll.u32 [#allocation4], 4
      %s44 = int_to_ptr.vmem [resolvable:$true] %s43
      %49 = dma.hbm_to_vmem [thread:$0]  %s5, 512, %s44, [#allocation5], 128, 128, 8
    $region25: #{tpu_custom_call.1} parent=1 // pred_fallthru
      _
    // Predicated region
    $region26: #{tpu_custom_call.1} parent=1 // pred_check
      _
    $region27: #{tpu_custom_call.1} parent=1 // pred_check_branch
      %51 = sbr.rel (0) target = $region29
    $region28: #{tpu_custom_call.1} parent=1 // pred_region
      _
    $region29: #{tpu_custom_call.1} parent=1 // pred_fallthru
      _
    // Predicated region
    $region30: #{tpu_custom_call.1} parent=1 // pred_check
      _
    $region31: #{tpu_custom_call.1} parent=1 // pred_check_branch
      %53 = sbr.rel (0) target = $region33
    $region32: #{tpu_custom_call.1} parent=1 // pred_region
      %s55 = ssub.s32 512, 512
      %56 = vsyncadd [#allocation5], %s55
      %s57 = sshll.u32 [#allocation6], 4
      %s58 = int_to_ptr.vmem [resolvable:$true] %s57
      %63 = dma.hbm_to_vmem [thread:$0]  %s7, 512, %s58, [#allocation5], 128, 128, 8
    $region33: #{tpu_custom_call.1} parent=1 // pred_fallthru
      _
    // Predicated region
    $region34: #{tpu_custom_call.1} parent=1 // pred_check
      _
    $region35: #{tpu_custom_call.1} parent=1 // pred_check_branch
      %65 = sbr.rel (0) target = $region37
    $region36: #{tpu_custom_call.1} parent=1 // pred_region
      _
    $region37: #{tpu_custom_call.1} parent=1 // pred_fallthru
      _
    // Predicated region
    $region38: #{tpu_custom_call.1} parent=1 // pred_check
      _
    $region39: #{tpu_custom_call.1} parent=1 // pred_check_branch
      %67 = sbr.rel (0) target = $region41
    $region40: #{tpu_custom_call.1} parent=1 // pred_region
      _
    $region41: #{tpu_custom_call.1} parent=1 // pred_fallthru
      _
    // Predicated region
    $region42: #{tpu_custom_call.1} parent=1 // pred_check
      _
    $region43: #{tpu_custom_call.1} parent=1 // pred_check_branch
      %69 = sbr.rel (0) target = $region45
    $region44: #{tpu_custom_call.1} parent=1 // pred_region
      _
    $region45: #{tpu_custom_call.1} parent=1 // pred_fallthru
      _
    // Predicated region
    $region46: #{tpu_custom_call.1} parent=1 // pred_check
      _
    $region47: #{tpu_custom_call.1} parent=1 // pred_check_branch
      %71 = sbr.rel (0) target = $region49
    $region48: #{tpu_custom_call.1} parent=1 // pred_region
      %72 = dma.done [#allocation3], 256
    $region49: #{tpu_custom_call.1} parent=1 // pred_fallthru
      _
    // Predicated region
    $region50: #{tpu_custom_call.1} parent=1 // pred_check
      _
    $region51: #{tpu_custom_call.1} parent=1 // pred_check_branch
      %74 = sbr.rel (0) target = $region53
    $region52: #{tpu_custom_call.1} parent=1 // pred_region
      %75 = dma.done [#allocation5], 512
    $region53: #{tpu_custom_call.1} parent=1 // pred_fallthru
      _
    // Predicated region
    $region54: #{tpu_custom_call.1} parent=1 // pred_check
      _
    $region55: #{tpu_custom_call.1} parent=1 // pred_check_branch
      %77 = sbr.rel (0) target = $region57
    $region56: #{tpu_custom_call.1} parent=1 // pred_region
      %78 = dma.done [#allocation5], 512
    $region57: #{tpu_custom_call.1} parent=1 // pred_fallthru
      _
    %v79 = vld [vmem:[%s0] sm:$0xff]
    %v80 = vld [vmem:[#allocation2] sm:$0xff]
    %v81 = vld [vmem:[#allocation2 + $0x8] sm:$0xff]
    %v82 = vld [vmem:[%s2] sm:$0x1]
    %v84 = vlaneseq
    %v85 = vshrl.u32 %v84, 7
    %v86 = vsub.s32 0, %v85
    %v87 = vrot.slane %v82, %v86
    %vm89 = vcmask 130048
    %v91 = vsel %vm89, %v79, 0
    %93 = vmatprep.subr.mxu0 0.0
    %94 = vmatpush1.msra.mxu0 %v80
    %95 = vmatprep.subr.mxu0 0.0
    %96 = vmatpush1.msra.mxu0 %v81
    %97 = vmatprep.subr.mxu0 0.0
    %98 = vmatpush1.msra.mxu0 0.0
    %99 = vmatprep.subr.mxu0 0.0
    %100 = vmatpush1.msra.mxu0 0.0
    %101 = vmatprep.subr.mxu0 0.0
    %102 = vmatpush1.msra.mxu0 0.0
    %103 = vmatprep.subr.mxu0 0.0
    %104 = vmatpush1.msra.mxu0 0.0
    %105 = vmatprep.subr.mxu0 0.0
    %106 = vmatpush1.msra.mxu0 0.0
    %107 = vmatprep.subr.mxu0 0.0
    %108 = vmatpush1.msra.mxu0 0.0
    %109 = vmatprep.subr.mxu0 0.0
    %110 = vmatpush1.msra.mxu0 0.0
    %111 = vmatprep.subr.mxu0 0.0
    %112 = vmatpush1.msra.mxu0 0.0
    %113 = vmatprep.subr.mxu0 0.0
    %114 = vmatpush1.msra.mxu0 0.0
    %115 = vmatprep.subr.mxu0 0.0
    %116 = vmatpush1.msra.mxu0 0.0
    %117 = vmatprep.subr.mxu0 0.0
    %118 = vmatpush1.msra.mxu0 0.0
    %119 = vmatprep.subr.mxu0 0.0
    %120 = vmatpush1.msra.mxu0 0.0
    %121 = vmatprep.subr.mxu0 0.0
    %122 = vmatpush1.msra.mxu0 0.0
    %123 = vmatprep.subr.mxu0 0.0
    %124 = vmatpush1.msra.mxu0 0.0
    %125 = vmatprep.subr.mxu0 0.0
    %126 = vmatpush1.msra.mxu0 0.0
    %127 = vmatprep.subr.mxu0 0.0
    %128 = vmatpush1.msra.mxu0 0.0
    %129 = vmatprep.subr.mxu0 0.0
    %130 = vmatpush1.msra.mxu0 0.0
    %131 = vmatprep.subr.mxu0 0.0
    %132 = vmatpush1.msra.mxu0 0.0
    %133 = vmatprep.subr.mxu0 0.0
    %134 = vmatpush1.msra.mxu0 0.0
    %135 = vmatprep.subr.mxu0 0.0
    %136 = vmatpush1.msra.mxu0 0.0
    %137 = vmatprep.subr.mxu0 0.0
    %138 = vmatpush1.msra.mxu0 0.0
    %139 = vmatprep.subr.mxu0 0.0
    %140 = vmatpush1.msra.mxu0 0.0
    %141 = vmatprep.subr.mxu0 0.0
    %142 = vmatpush1.msra.mxu0 0.0
    %143 = vmatprep.subr.mxu0 0.0
    %144 = vmatpush1.msra.mxu0 0.0
    %145 = vmatprep.subr.mxu0 0.0
    %146 = vmatpush1.msra.mxu0 0.0
    %147 = vmatprep.subr.mxu0 0.0
    %148 = vmatpush1.msra.mxu0 0.0
    %149 = vmatprep.subr.mxu0 0.0
    %150 = vmatpush1.msra.mxu0 0.0
    %151 = vmatprep.subr.mxu0 0.0
    %152 = vmatpush1.msra.mxu0 0.0
    %153 = vmatprep.subr.mxu0 0.0
    %154 = vmatpush1.msra.mxu0 0.0
    %155 = vmatprep.subr.mxu0 0.0
    %156 = vmatpush1.msra.mxu0 0.0
    %157 = vmatprep.mubr.f32.mxu0 0.0
    %158 = vmatmul.mubr.f32.gmra.mrb[0].mxu0 %v91
    %v159 = vpop.f32.mrb[0].mxu0
    %v160 = vadd.f32 %v87, %v159
    %v161 = vpop.f32.mrb[0].mxu0
    %162 = vdwg.mxu0
    %v163 = vmax.f32 %v160, 0.0
    %v164 = vld [vmem:[%s3] sm:$0xff]
    %v165 = vld [vmem:[%s3 + $0x8] sm:$0xff]
    %v166 = vld [vmem:[%s3 + $0x10] sm:$0xff]
    %v167 = vld [vmem:[%s3 + $0x18] sm:$0xff]
    %v168 = vld [vmem:[%s4] sm:$0x1]
    %v170 = vlaneseq
    %v171 = vshrl.u32 %v170, 7
    %v172 = vsub.s32 0, %v171
    %v173 = vrot.slane %v168, %v172
    %vm175 = vcmask 261120
    %v177 = vsel %vm175, %v163, 0
    %179 = vmatprep.subr.mxu0 0.0
    %180 = vmatpush1.msra.mxu0 %v164
    %181 = vmatprep.subr.mxu0 0.0
    %182 = vmatpush1.msra.mxu0 %v165
    %183 = vmatprep.subr.mxu0 0.0
    %184 = vmatpush1.msra.mxu0 %v166
    %185 = vmatprep.subr.mxu0 0.0
    %186 = vmatpush1.msra.mxu0 %v167
    %187 = vmatprep.subr.mxu0 0.0
    %188 = vmatpush1.msra.mxu0 0.0
    %189 = vmatprep.subr.mxu0 0.0
    %190 = vmatpush1.msra.mxu0 0.0
    %191 = vmatprep.subr.mxu0 0.0
    %192 = vmatpush1.msra.mxu0 0.0
    %193 = vmatprep.subr.mxu0 0.0
    %194 = vmatpush1.msra.mxu0 0.0
    %195 = vmatprep.subr.mxu0 0.0
    %196 = vmatpush1.msra.mxu0 0.0
    %197 = vmatprep.subr.mxu0 0.0
    %198 = vmatpush1.msra.mxu0 0.0
    %199 = vmatprep.subr.mxu0 0.0
    %200 = vmatpush1.msra.mxu0 0.0
    %201 = vmatprep.subr.mxu0 0.0
    %202 = vmatpush1.msra.mxu0 0.0
    %203 = vmatprep.subr.mxu0 0.0
    %204 = vmatpush1.msra.mxu0 0.0
    %205 = vmatprep.subr.mxu0 0.0
    %206 = vmatpush1.msra.mxu0 0.0
    %207 = vmatprep.subr.mxu0 0.0
    %208 = vmatpush1.msra.mxu0 0.0
    %209 = vmatprep.subr.mxu0 0.0
    %210 = vmatpush1.msra.mxu0 0.0
    %211 = vmatprep.subr.mxu0 0.0
    %212 = vmatpush1.msra.mxu0 0.0
    %213 = vmatprep.subr.mxu0 0.0
    %214 = vmatpush1.msra.mxu0 0.0
    %215 = vmatprep.subr.mxu0 0.0
    %216 = vmatpush1.msra.mxu0 0.0
    %217 = vmatprep.subr.mxu0 0.0
    %218 = vmatpush1.msra.mxu0 0.0
    %219 = vmatprep.subr.mxu0 0.0
    %220 = vmatpush1.msra.mxu0 0.0
    %221 = vmatprep.subr.mxu0 0.0
    %222 = vmatpush1.msra.mxu0 0.0
    %223 = vmatprep.subr.mxu0 0.0
    %224 = vmatpush1.msra.mxu0 0.0
    %225 = vmatprep.subr.mxu0 0.0
    %226 = vmatpush1.msra.mxu0 0.0
    %227 = vmatprep.subr.mxu0 0.0
    %228 = vmatpush1.msra.mxu0 0.0
    %229 = vmatprep.subr.mxu0 0.0
    %230 = vmatpush1.msra.mxu0 0.0
    %231 = vmatprep.subr.mxu0 0.0
    %232 = vmatpush1.msra.mxu0 0.0
    %233 = vmatprep.subr.mxu0 0.0
    %234 = vmatpush1.msra.mxu0 0.0
    %235 = vmatprep.subr.mxu0 0.0
    %236 = vmatpush1.msra.mxu0 0.0
    %237 = vmatprep.subr.mxu0 0.0
    %238 = vmatpush1.msra.mxu0 0.0
    %239 = vmatprep.subr.mxu0 0.0
    %240 = vmatpush1.msra.mxu0 0.0
    %241 = vmatprep.subr.mxu0 0.0
    %242 = vmatpush1.msra.mxu0 0.0
    %243 = vmatprep.mubr.f32.mxu0 0.0
    %244 = vmatmul.mubr.f32.gmra.mrb[0].mxu0 %v177
    %v245 = vpop.f32.mrb[0].mxu0
    %v246 = vadd.f32 %v173, %v245
    %v247 = vpop.f32.mrb[0].mxu0
    %248 = vdwg.mxu0
    %v249 = vmax.f32 %v246, 0.0
    %v250 = vld [vmem:[#allocation4] sm:$0xff]
    %v251 = vld [vmem:[#allocation4 + $0x8] sm:$0xff]
    %v252 = vld [vmem:[#allocation4 + $0x10] sm:$0xff]
    %v253 = vld [vmem:[#allocation4 + $0x18] sm:$0xff]
    %v254 = vld [vmem:[%s6] sm:$0x1]
    %v256 = vlaneseq
    %v257 = vshrl.u32 %v256, 7
    %v258 = vsub.s32 0, %v257
    %v259 = vrot.slane %v254, %v258
    %v262 = vsel %vm175, %v249, 0
    %264 = vmatprep.subr.mxu0 0.0
    %265 = vmatpush1.msra.mxu0 %v250
    %266 = vmatprep.subr.mxu0 0.0
    %267 = vmatpush1.msra.mxu0 %v251
    %268 = vmatprep.subr.mxu0 0.0
    %269 = vmatpush1.msra.mxu0 %v252
    %270 = vmatprep.subr.mxu0 0.0
    %271 = vmatpush1.msra.mxu0 %v253
    %272 = vmatprep.subr.mxu0 0.0
    %273 = vmatpush1.msra.mxu0 0.0
    %274 = vmatprep.subr.mxu0 0.0
    %275 = vmatpush1.msra.mxu0 0.0
    %276 = vmatprep.subr.mxu0 0.0
    %277 = vmatpush1.msra.mxu0 0.0
    %278 = vmatprep.subr.mxu0 0.0
    %279 = vmatpush1.msra.mxu0 0.0
    %280 = vmatprep.subr.mxu0 0.0
    %281 = vmatpush1.msra.mxu0 0.0
    %282 = vmatprep.subr.mxu0 0.0
    %283 = vmatpush1.msra.mxu0 0.0
    %284 = vmatprep.subr.mxu0 0.0
    %285 = vmatpush1.msra.mxu0 0.0
    %286 = vmatprep.subr.mxu0 0.0
    %287 = vmatpush1.msra.mxu0 0.0
    %288 = vmatprep.subr.mxu0 0.0
    %289 = vmatpush1.msra.mxu0 0.0
    %290 = vmatprep.subr.mxu0 0.0
    %291 = vmatpush1.msra.mxu0 0.0
    %292 = vmatprep.subr.mxu0 0.0
    %293 = vmatpush1.msra.mxu0 0.0
    %294 = vmatprep.subr.mxu0 0.0
    %295 = vmatpush1.msra.mxu0 0.0
    %296 = vmatprep.subr.mxu0 0.0
    %297 = vmatpush1.msra.mxu0 0.0
    %298 = vmatprep.subr.mxu0 0.0
    %299 = vmatpush1.msra.mxu0 0.0
    %300 = vmatprep.subr.mxu0 0.0
    %301 = vmatpush1.msra.mxu0 0.0
    %302 = vmatprep.subr.mxu0 0.0
    %303 = vmatpush1.msra.mxu0 0.0
    %304 = vmatprep.subr.mxu0 0.0
    %305 = vmatpush1.msra.mxu0 0.0
    %306 = vmatprep.subr.mxu0 0.0
    %307 = vmatpush1.msra.mxu0 0.0
    %308 = vmatprep.subr.mxu0 0.0
    %309 = vmatpush1.msra.mxu0 0.0
    %310 = vmatprep.subr.mxu0 0.0
    %311 = vmatpush1.msra.mxu0 0.0
    %312 = vmatprep.subr.mxu0 0.0
    %313 = vmatpush1.msra.mxu0 0.0
    %314 = vmatprep.subr.mxu0 0.0
    %315 = vmatpush1.msra.mxu0 0.0
    %316 = vmatprep.subr.mxu0 0.0
    %317 = vmatpush1.msra.mxu0 0.0
    %318 = vmatprep.subr.mxu0 0.0
    %319 = vmatpush1.msra.mxu0 0.0
    %320 = vmatprep.subr.mxu0 0.0
    %321 = vmatpush1.msra.mxu0 0.0
    %322 = vmatprep.subr.mxu0 0.0
    %323 = vmatpush1.msra.mxu0 0.0
    %324 = vmatprep.subr.mxu0 0.0
    %325 = vmatpush1.msra.mxu0 0.0
    %326 = vmatprep.subr.mxu0 0.0
    %327 = vmatpush1.msra.mxu0 0.0
    %328 = vmatprep.mubr.f32.mxu0 0.0
    %329 = vmatmul.mubr.f32.gmra.mrb[0].mxu0 %v262
    %v330 = vpop.f32.mrb[0].mxu0
    %v331 = vadd.f32 %v259, %v330
    %v332 = vpop.f32.mrb[0].mxu0
    %333 = vdwg.mxu0
    %v334 = vmax.f32 %v331, 0.0
    %v335 = vld [vmem:[#allocation6] sm:$0xff]
    %v336 = vld [vmem:[#allocation6 + $0x8] sm:$0xff]
    %v337 = vld [vmem:[#allocation6 + $0x10] sm:$0xff]
    %v338 = vld [vmem:[#allocation6 + $0x18] sm:$0xff]
    %v339 = vld [vmem:[%s8] sm:$0x1]
    %v341 = vlaneseq
    %v342 = vshrl.u32 %v341, 7
    %v343 = vsub.s32 0, %v342
    %v344 = vrot.slane %v339, %v343
    %v347 = vsel %vm175, %v334, 0
    %349 = vmatprep.subr.mxu0 0.0
    %350 = vmatpush1.msra.mxu0 %v335
    %351 = vmatprep.subr.mxu0 0.0
    %352 = vmatpush1.msra.mxu0 %v336
    %353 = vmatprep.subr.mxu0 0.0
    %354 = vmatpush1.msra.mxu0 %v337
    %355 = vmatprep.subr.mxu0 0.0
    %356 = vmatpush1.msra.mxu0 %v338
    %357 = vmatprep.subr.mxu0 0.0
    %358 = vmatpush1.msra.mxu0 0.0
    %359 = vmatprep.subr.mxu0 0.0
    %360 = vmatpush1.msra.mxu0 0.0
    %361 = vmatprep.subr.mxu0 0.0
    %362 = vmatpush1.msra.mxu0 0.0
    %363 = vmatprep.subr.mxu0 0.0
    %364 = vmatpush1.msra.mxu0 0.0
    %365 = vmatprep.subr.mxu0 0.0
    %366 = vmatpush1.msra.mxu0 0.0
    %367 = vmatprep.subr.mxu0 0.0
    %368 = vmatpush1.msra.mxu0 0.0
    %369 = vmatprep.subr.mxu0 0.0
    %370 = vmatpush1.msra.mxu0 0.0
    %371 = vmatprep.subr.mxu0 0.0
    %372 = vmatpush1.msra.mxu0 0.0
    %373 = vmatprep.subr.mxu0 0.0
    %374 = vmatpush1.msra.mxu0 0.0
    %375 = vmatprep.subr.mxu0 0.0
    %376 = vmatpush1.msra.mxu0 0.0
    %377 = vmatprep.subr.mxu0 0.0
    %378 = vmatpush1.msra.mxu0 0.0
    %379 = vmatprep.subr.mxu0 0.0
    %380 = vmatpush1.msra.mxu0 0.0
    %381 = vmatprep.subr.mxu0 0.0
    %382 = vmatpush1.msra.mxu0 0.0
    %383 = vmatprep.subr.mxu0 0.0
    %384 = vmatpush1.msra.mxu0 0.0
    %385 = vmatprep.subr.mxu0 0.0
    %386 = vmatpush1.msra.mxu0 0.0
    %387 = vmatprep.subr.mxu0 0.0
    %388 = vmatpush1.msra.mxu0 0.0
    %389 = vmatprep.subr.mxu0 0.0
    %390 = vmatpush1.msra.mxu0 0.0
    %391 = vmatprep.subr.mxu0 0.0
    %392 = vmatpush1.msra.mxu0 0.0
    %393 = vmatprep.subr.mxu0 0.0
    %394 = vmatpush1.msra.mxu0 0.0
    %395 = vmatprep.subr.mxu0 0.0
    %396 = vmatpush1.msra.mxu0 0.0
    %397 = vmatprep.subr.mxu0 0.0
    %398 = vmatpush1.msra.mxu0 0.0
    %399 = vmatprep.subr.mxu0 0.0
    %400 = vmatpush1.msra.mxu0 0.0
    %401 = vmatprep.subr.mxu0 0.0
    %402 = vmatpush1.msra.mxu0 0.0
    %403 = vmatprep.subr.mxu0 0.0
    %404 = vmatpush1.msra.mxu0 0.0
    %405 = vmatprep.subr.mxu0 0.0
    %406 = vmatpush1.msra.mxu0 0.0
    %407 = vmatprep.subr.mxu0 0.0
    %408 = vmatpush1.msra.mxu0 0.0
    %409 = vmatprep.subr.mxu0 0.0
    %410 = vmatpush1.msra.mxu0 0.0
    %411 = vmatprep.subr.mxu0 0.0
    %412 = vmatpush1.msra.mxu0 0.0
    %413 = vmatprep.mubr.f32.mxu0 0.0
    %414 = vmatmul.mubr.f32.gmra.mrb[0].mxu0 %v347
    %v415 = vpop.f32.mrb[0].mxu0
    %v416 = vadd.f32 %v344, %v415
    %v417 = vpop.f32.mrb[0].mxu0
    %418 = vdwg.mxu0
    %v419 = vmax.f32 %v416, 0.0
    %v420 = vld [vmem:[%s9] sm:$0xff]
    %v421 = vld [vmem:[%s9 + $0x8] sm:$0xff]
    %v422 = vld [vmem:[%s9 + $0x10] sm:$0xff]
    %v423 = vld [vmem:[%s9 + $0x18] sm:$0xff]
    %v424 = vld [vmem:[%s10] sm:$0x1]
    %v426 = vlaneseq
    %v427 = vshrl.u32 %v426, 7
    %v428 = vsub.s32 0, %v427
    %v429 = vrot.slane %v424, %v428
    %v432 = vsel %vm175, %v419, 0
    %434 = vmatprep.subr.mxu0 0.0
    %435 = vmatpush1.msra.mxu0 %v420
    %436 = vmatprep.subr.mxu0 0.0
    %437 = vmatpush1.msra.mxu0 %v421
    %438 = vmatprep.subr.mxu0 0.0
    %439 = vmatpush1.msra.mxu0 %v422
    %440 = vmatprep.subr.mxu0 0.0
    %441 = vmatpush1.msra.mxu0 %v423
    %442 = vmatprep.subr.mxu0 0.0
    %443 = vmatpush1.msra.mxu0 0.0
    %444 = vmatprep.subr.mxu0 0.0
    %445 = vmatpush1.msra.mxu0 0.0
    %446 = vmatprep.subr.mxu0 0.0
    %447 = vmatpush1.msra.mxu0 0.0
    %448 = vmatprep.subr.mxu0 0.0
    %449 = vmatpush1.msra.mxu0 0.0
    %450 = vmatprep.subr.mxu0 0.0
    %451 = vmatpush1.msra.mxu0 0.0
    %452 = vmatprep.subr.mxu0 0.0
    %453 = vmatpush1.msra.mxu0 0.0
    %454 = vmatprep.subr.mxu0 0.0
    %455 = vmatpush1.msra.mxu0 0.0
    %456 = vmatprep.subr.mxu0 0.0
    %457 = vmatpush1.msra.mxu0 0.0
    %458 = vmatprep.subr.mxu0 0.0
    %459 = vmatpush1.msra.mxu0 0.0
    %460 = vmatprep.subr.mxu0 0.0
    %461 = vmatpush1.msra.mxu0 0.0
    %462 = vmatprep.subr.mxu0 0.0
    %463 = vmatpush1.msra.mxu0 0.0
    %464 = vmatprep.subr.mxu0 0.0
    %465 = vmatpush1.msra.mxu0 0.0
    %466 = vmatprep.subr.mxu0 0.0
    %467 = vmatpush1.msra.mxu0 0.0
    %468 = vmatprep.subr.mxu0 0.0
    %469 = vmatpush1.msra.mxu0 0.0
    %470 = vmatprep.subr.mxu0 0.0
    %471 = vmatpush1.msra.mxu0 0.0
    %472 = vmatprep.subr.mxu0 0.0
    %473 = vmatpush1.msra.mxu0 0.0
    %474 = vmatprep.subr.mxu0 0.0
    %475 = vmatpush1.msra.mxu0 0.0
    %476 = vmatprep.subr.mxu0 0.0
    %477 = vmatpush1.msra.mxu0 0.0
    %478 = vmatprep.subr.mxu0 0.0
    %479 = vmatpush1.msra.mxu0 0.0
    %480 = vmatprep.subr.mxu0 0.0
    %481 = vmatpush1.msra.mxu0 0.0
    %482 = vmatprep.subr.mxu0 0.0
    %483 = vmatpush1.msra.mxu0 0.0
    %484 = vmatprep.subr.mxu0 0.0
    %485 = vmatpush1.msra.mxu0 0.0
    %486 = vmatprep.subr.mxu0 0.0
    %487 = vmatpush1.msra.mxu0 0.0
    %488 = vmatprep.subr.mxu0 0.0
    %489 = vmatpush1.msra.mxu0 0.0
    %490 = vmatprep.subr.mxu0 0.0
    %491 = vmatpush1.msra.mxu0 0.0
    %492 = vmatprep.subr.mxu0 0.0
    %493 = vmatpush1.msra.mxu0 0.0
    %494 = vmatprep.subr.mxu0 0.0
    %495 = vmatpush1.msra.mxu0 0.0
    %496 = vmatprep.subr.mxu0 0.0
    %497 = vmatpush1.msra.mxu0 0.0
    %498 = vmatprep.mubr.f32.mxu0 0.0
    %499 = vmatmul.mubr.f32.gmra.mrb[0].mxu0 %v432
    %v500 = vpop.f32.mrb[0].mxu0
    %v501 = vadd.f32 %v429, %v500
    %v502 = vpop.f32.mrb[0].mxu0
    %503 = vdwg.mxu0
    %vm504 = vcmask 31744
    %505 = vst.msk [vmem:[%s11] sm:$0xff] %vm504, %v501
    // Predicated region
    $region58: #{tpu_custom_call.1} parent=1 // pred_check
      _
    $region59: #{tpu_custom_call.1} parent=1 // pred_check_branch
      %507 = sbr.rel (0) target = $region61
    $region60: #{tpu_custom_call.1} parent=1 // pred_region
      _
    $region61: #{tpu_custom_call.1} parent=1 // pred_fallthru
      _
    // Predicated region
    $region62: #{tpu_custom_call.1} parent=1 // pred_check
      _
    $region63: #{tpu_custom_call.1} parent=1 // pred_check_branch
      %509 = sbr.rel (0) target = $region65
    $region64: #{tpu_custom_call.1} parent=1 // pred_region
      _
    $region65: #{tpu_custom_call.1} parent=1 // pred_fallthru
      _
    %510 = vsyncpa [#allocation3], 1
    %511 = vsyncpa [#allocation5], 1

</llo_original>
